<compile_context>
chip_gen: v7x
topology: tpu7x:2x2x1
jax: 0.10.0
libtpu: 0.0.40
codegen_flags: <defaults>
</compile_context>

<pallas_src>
import functools
import math

import jax
import jax.numpy as jnp
from jax.experimental import pallas as pl
from jax.experimental.pallas import tpu as pltpu

_LANES = 128
_MAX_ROW_TILE = 8192            # safety cap on rows per block
_MAX_PACK_WIDTH = 512           # max packed lane width (lcm(d_hid, 128))


def _cdiv(a, b):
    return (a + b - 1) // b


def _sublane(dtype):
    # minimum sublane packing for the block's second-to-last dim
    return {4: 8, 2: 16, 1: 32}.get(jnp.dtype(dtype).itemsize, 8)


@functools.lru_cache(maxsize=None)
def _hw_params():
    """Per-generation (target_tile_bytes, vmem_limit_bytes)."""
    vmem = 64 * 1024 * 1024
    try:
        vmem = int(pltpu.get_tpu_info().vmem_capacity_bytes)
    except Exception:
        pass
    if vmem >= 100 * 1024 * 1024:                     # v5e / v6e: 128 MiB VMEM
        return 4 * 1024 * 1024, 64 * 1024 * 1024
    return 2 * 1024 * 1024, 32 * 1024 * 1024          # v7x: 64 MiB per TC


def _pick_row_tile(n_rows, row_bytes, sublane, target_tile_bytes):
    """Large, sublane-aligned row tile with >=4 (even) balanced grid steps."""
    if n_rows <= 4 * sublane:
        return n_rows                                  # tiny: one full block
    rt = max(sublane, target_tile_bytes // max(row_bytes, 1))
    rt = min(rt, _MAX_ROW_TILE)
    # >=4 steps so each v7x TensorCore gets >=2 blocks (keeps the BlockSpec
    # pipeline overlapping per-core); even step count balances the two cores.
    steps = max(4, _cdiv(n_rows, rt))
    if steps % 2:
        steps += 1
    rt = _cdiv(n_rows, steps)
    rt = max(sublane, _cdiv(rt, sublane) * sublane)    # sublane-aligned
    return min(rt, n_rows)


@functools.lru_cache(maxsize=None)
def _block_diag(d_hid, width):
    """(width, width) 0/1 block-diagonal segment-sum matrix; exact in bf16."""
    seg = jnp.arange(width, dtype=jnp.int32) // d_hid
    return (seg[:, None] == seg[None, :]).astype(jnp.bfloat16)


def _ln_rows_kernel(z_ref, a_ref, b_ref, o_ref, *, eps, d_hid):
    """Generic path: one normalization group per row, d_hid lanes wide."""
    z = z_ref[...].astype(jnp.float32)                          # (rt, d_hid)
    mu = jnp.mean(z, axis=-1, keepdims=True)
    diff = z - mu
    # torch.std default is unbiased (divide by N-1).  d_hid == 1 -> 0/0 = NaN,
    # matching torch.std(ddof=1) on a single element.
    var = jnp.sum(diff * diff, axis=-1, keepdims=True) / jnp.float32(d_hid - 1)
    inv = 1.0 / (jnp.sqrt(var) + eps)                           # one recip per row
    out = diff * inv * a_ref[...] + b_ref[...]
    o_ref[...] = out.astype(o_ref.dtype)


def _ln_packed_kernel(z_ref, a_ref, b_ref, p_ref, o_ref, *, eps, d_hid):
    """Lane-dense path: G = W // d_hid rows packed per W-lane vreg row.

    p_ref is a (W, W) 0/1 block-diagonal matrix (bf16, exact); z @ p gives, at
    every lane, the sum over that lane's d_hid-wide segment (reduce + broadcast
    in one MXU matmul).  Since p is exact in bf16, only z needs a hi/lo split
    (2 bf16 passes ~ f32 accuracy, vs 6 passes for Precision.HIGHEST).
    """
    z = z_ref[...].astype(jnp.float32)                          # (rt, W)
    p = p_ref[...]                                              # (W, W) bf16

    def seg_sum(x):
        hi = x.astype(jnp.bfloat16)
        lo = (x - hi.astype(jnp.float32)).astype(jnp.bfloat16)
        return (jnp.dot(hi, p, preferred_element_type=jnp.float32)
                + jnp.dot(lo, p, preferred_element_type=jnp.float32))

    mu = seg_sum(z) * jnp.float32(1.0 / d_hid)
    diff = z - mu
    var = seg_sum(diff * diff) * jnp.float32(1.0 / (d_hid - 1))
    sigma = jnp.sqrt(var)
    # Exact reciprocal: pl.reciprocal(..., approx=True) is ~12-bit and would
    # fail the 1e-5 tolerance vs. the f32 reference.
    inv = 1.0 / (sigma + eps)
    out = diff * inv * a_ref[...] + b_ref[...]
    o_ref[...] = out.astype(o_ref.dtype)


def layer_normalization(z, a_2, b_2, eps=0.001):
    """Forward pass of LayerNormalization.

    z:   (batch, seq, d_hid) or any (..., d_hid)
    a_2: (d_hid,) scale, b_2: (d_hid,) shift
    """
    # PyTorch: `if z.size(1) == 1: return z` (static shape -> Python check)
    if z.ndim >= 2 and z.shape[1] == 1:
        return z

    d_hid = z.shape[-1]
    lead_shape = z.shape[:-1]
    rows = math.prod(lead_shape) if lead_shape else 1

    eps = float(eps)
    dtype_bytes = jnp.dtype(z.dtype).itemsize
    sub = _sublane(z.dtype)
    target_tile_bytes, vmem_limit = _hw_params()

    # Pre-cast params once in the wrapper (not per grid step in the kernel).
    a32 = a_2.astype(jnp.float32).reshape(1, d_hid)
    b32 = b_2.astype(jnp.float32).reshape(1, d_hid)

    # ---- Lane-dense packed path (d_hid < 128, lcm(d_hid, 128) <= 512) ------
    packable = False
    W = 0
    if 2 <= d_hid < _LANES:
        W = (d_hid * _LANES) // math.gcd(d_hid, _LANES)         # lcm
        packable = W <= _MAX_PACK_WIDTH

    if packable:
        G = W // d_hid
        pad_rows = (-rows) % G
        z2 = z.reshape(rows, d_hid)
        if pad_rows:
            # Padding costs one extra copy of the array; still a net win versus
            # the generic path's ~d_hid/128 lane utilization, and the common
            # rows % G == 0 case pays nothing.
            z2 = jnp.pad(z2, ((0, pad_rows), (0, 0)))
        total_rows = rows + pad_rows
        n_rows = total_rows // G
        z_packed = z2.reshape(n_rows, W)                        # free row-major view
        a_t = jnp.tile(a32, (1, G))                             # (1, W)
        b_t = jnp.tile(b32, (1, G))
        p = _block_diag(d_hid, W)                               # (W, W) bf16, cached

        rt = _pick_row_tile(n_rows, W * dtype_bytes, sub, target_tile_bytes)
        grid = (_cdiv(n_rows, rt),)
        kernel = functools.partial(_ln_packed_kernel, eps=eps, d_hid=d_hid)
        cost = pl.CostEstimate(
            flops=int(8 * n_rows * W * W + 10 * rows * d_hid),
            transcendentals=int(2 * n_rows * W),
            bytes_accessed=int(2 * rows * d_hid * dtype_bytes))

        out = pl.pallas_call(
            kernel,
            out_shape=jax.ShapeDtypeStruct((n_rows, W), z.dtype),
            grid_spec=pltpu.PrefetchScalarGridSpec(
                num_scalar_prefetch=0,
                grid=grid,
                in_specs=[
                    pl.BlockSpec((rt, W), lambda i: (i, 0)),    # packed rows tile
                    pl.BlockSpec((1, W), lambda i: (0, 0)),     # a_2 (resident)
                    pl.BlockSpec((1, W), lambda i: (0, 0)),     # b_2 (resident)
                    pl.BlockSpec((W, W), lambda i: (0, 0)),     # segment-sum matrix
                ],
                out_specs=pl.BlockSpec((rt, W), lambda i: (i, 0)),
            ),
            compiler_params=pltpu.CompilerParams(
                dimension_semantics=("parallel",),
                vmem_limit_bytes=vmem_limit),
            cost_estimate=cost,
        )(z_packed, a_t, b_t, p)

        out = out.reshape(total_rows, d_hid)
        if pad_rows:
            out = out[:rows]
        return out.reshape(*lead_shape, d_hid)

    # ---- Generic path (any d_hid; lane-dense when d_hid % 128 == 0) --------
    z2 = z.reshape(rows, d_hid)
    rt = _pick_row_tile(rows, d_hid * dtype_bytes, sub, target_tile_bytes)
    grid = (_cdiv(rows, rt),)                                   # partial tail is masked
    kernel = functools.partial(_ln_rows_kernel, eps=eps, d_hid=d_hid)
    cost = pl.CostEstimate(
        flops=int(10 * rows * d_hid),
        transcendentals=int(2 * rows),
        bytes_accessed=int(2 * rows * d_hid * dtype_bytes))

    out = pl.pallas_call(
        kernel,
        out_shape=jax.ShapeDtypeStruct((rows, d_hid), z.dtype),
        grid_spec=pltpu.PrefetchScalarGridSpec(
            num_scalar_prefetch=0,
            grid=grid,
            in_specs=[
                pl.BlockSpec((rt, d_hid), lambda i: (i, 0)),    # z rows tile
                pl.BlockSpec((1, d_hid), lambda i: (0, 0)),     # a_2 (resident)
                pl.BlockSpec((1, d_hid), lambda i: (0, 0)),     # b_2 (resident)
            ],
            out_specs=pl.BlockSpec((rt, d_hid), lambda i: (i, 0)),
        ),
        compiler_params=pltpu.CompilerParams(
            dimension_semantics=("parallel",),
            vmem_limit_bytes=vmem_limit),
        cost_estimate=cost,
    )(z2, a32, b32)
    return out.reshape(*lead_shape, d_hid)


def _reference(z, a_2, b_2, eps=0.001):
    if z.ndim >= 2 and z.shape[1] == 1:
        return z
    mu = jnp.mean(z, axis=-1, keepdims=True)
    sigma = jnp.std(z, axis=-1, keepdims=True, ddof=1)
    out = (z - mu) / (sigma + eps)
    return out * a_2 + b_2


if __name__ == "__main__":
    eps = 0.001

    # 1) Packed path, W = 128 (d_hid divides 128), no padding.
    batch, seq, d_hid = 2, 8, 32
    z = jax.random.normal(jax.random.PRNGKey(0), (batch, seq, d_hid), dtype=jnp.float32)
    a_2 = jnp.ones((d_hid,), dtype=jnp.float32)
    b_2 = jnp.zeros((d_hid,), dtype=jnp.float32)
    out = jax.block_until_ready(layer_normalization(z, a_2, b_2, eps=eps))
    assert out.shape == z.shape
    assert jnp.allclose(out, _reference(z, a_2, b_2, eps=eps), atol=1e-5, rtol=1e-5), \
        "mismatch vs reference (packed, W=128)"

    # 2) Packed path, W = 384 (d_hid = 48) with row padding (26 % 8 != 0).
    z3 = jax.random.normal(jax.random.PRNGKey(1), (2, 13, 48), dtype=jnp.float32)
    a3 = jnp.ones((48,), dtype=jnp.float32)
    b3 = jnp.zeros((48,), dtype=jnp.float32)
    out3 = jax.block_until_ready(layer_normalization(z3, a3, b3, eps=eps))
    assert jnp.allclose(out3, _reference(z3, a3, b3, eps=eps), atol=1e-5, rtol=1e-5), \
        "mismatch vs reference (packed, W=384, padded rows)"

    # 3) Generic path (lcm(80,128) > 512) with a partial tail tile.
    z4 = jax.random.normal(jax.random.PRNGKey(2), (2, 37, 80), dtype=jnp.float32)
    a4 = jnp.ones((80,), dtype=jnp.float32)
    b4 = jnp.zeros((80,), dtype=jnp.float32)
    out4 = jax.block_until_ready(layer_normalization(z4, a4, b4, eps=eps))
    assert jnp.allclose(out4, _reference(z4, a4, b4, eps=eps), atol=1e-5, rtol=1e-5), \
        "mismatch vs reference (generic, d_hid=80)"

    # 4) Generic path, lane-dense d_hid >= 128.
    z5 = jax.random.normal(jax.random.PRNGKey(3), (2, 6, 256), dtype=jnp.float32)
    a5 = jnp.ones((256,), dtype=jnp.float32)
    b5 = jnp.zeros((256,), dtype=jnp.float32)
    out5 = jax.block_until_ready(layer_normalization(z5, a5, b5, eps=eps))
    assert jnp.allclose(out5, _reference(z5, a5, b5, eps=eps), atol=1e-5, rtol=1e-5), \
        "mismatch vs reference (generic, d_hid=256)"

    # 5) seq == 1 early return (matches `if z.size(1) == 1: return z`).
    z6 = jax.random.normal(jax.random.PRNGKey(4), (2, 1, 32), dtype=jnp.float32)
    out6 = layer_normalization(z6, a_2, b_2, eps=eps)
    assert out6 is z6 or bool(jnp.all(out6 == z6)), "seq==1 must return z unchanged"

    print("KERNEL_OK")
</pallas_src>

<mosaic_0001>
module attributes {stable_mosaic.version = 11 : i64} {
  func.func @_ln_packed_kernel(%arg0: i32, %arg1: memref<4x128xf32, #tpu.memory_space<vmem>>, %arg2: memref<1x128xf32, #tpu.memory_space<vmem>>, %arg3: memref<1x128xf32, #tpu.memory_space<vmem>>, %arg4: memref<128x128xbf16, #tpu.memory_space<vmem>>, %arg5: memref<4x128xf32, #tpu.memory_space<vmem>>) attributes {dimension_semantics = [#tpu.dimension_semantics<parallel>], iteration_bounds = array<i64: 1>, scalar_prefetch = 0 : i64, scratch_operands = 0 : i64, tpu.core_type = #tpu.core_type<tc>, window_params = [{transform_indices = @transform_0, window_bounds = array<i64: 4, 128>}, {pipeline_mode = #tpu.pipeline_mode<synchronous>, transform_indices = @transform_1, window_bounds = array<i64: 1, 128>}, {pipeline_mode = #tpu.pipeline_mode<synchronous>, transform_indices = @transform_2, window_bounds = array<i64: 1, 128>}, {pipeline_mode = #tpu.pipeline_mode<synchronous>, transform_indices = @transform_3, window_bounds = array<i64: 128, 128>}, {transform_indices = @transform_4, window_bounds = array<i64: 4, 128>}]} {
    %c0 = arith.constant 0 : index
    %c0_0 = arith.constant 0 : index
    %0 = vector.load %arg1[%c0, %c0_0] : memref<4x128xf32, #tpu.memory_space<vmem>>, vector<4x128xf32>
    %c0_1 = arith.constant 0 : index
    %c0_2 = arith.constant 0 : index
    %1 = vector.load %arg4[%c0_1, %c0_2] : memref<128x128xbf16, #tpu.memory_space<vmem>>, vector<128x128xbf16>
    %2 = arith.truncf %0 : vector<4x128xf32> to vector<4x128xbf16>
    %3 = arith.extf %2 : vector<4x128xbf16> to vector<4x128xf32>
    %4 = arith.subf %0, %3 : vector<4x128xf32>
    %5 = arith.truncf %4 : vector<4x128xf32> to vector<4x128xbf16>
    %cst = arith.constant dense<0.000000e+00> : vector<4x128xf32>
    %6 = tpu.matmul %2, %1, %cst {dimension_numbers = #tpu.dot_dimension_numbers<[1], [0], [0], [1], [0, 0, 1, 1], [], []>} : vector<4x128xbf16>, vector<128x128xbf16>, vector<4x128xf32> -> vector<4x128xf32>
    %cst_3 = arith.constant dense<0.000000e+00> : vector<4x128xf32>
    %7 = tpu.matmul %5, %1, %cst_3 {dimension_numbers = #tpu.dot_dimension_numbers<[1], [0], [0], [1], [0, 0, 1, 1], [], []>} : vector<4x128xbf16>, vector<128x128xbf16>, vector<4x128xf32> -> vector<4x128xf32>
    %8 = arith.addf %6, %7 : vector<4x128xf32>
    %cst_4 = arith.constant 3.125000e-02 : f32
    %9 = vector.broadcast %cst_4 : f32 to vector<4x128xf32>
    %10 = arith.mulf %8, %9 : vector<4x128xf32>
    %11 = arith.subf %0, %10 : vector<4x128xf32>
    %12 = arith.mulf %11, %11 : vector<4x128xf32>
    %13 = arith.truncf %12 : vector<4x128xf32> to vector<4x128xbf16>
    %14 = arith.extf %13 : vector<4x128xbf16> to vector<4x128xf32>
    %15 = arith.subf %12, %14 : vector<4x128xf32>
    %16 = arith.truncf %15 : vector<4x128xf32> to vector<4x128xbf16>
    %cst_5 = arith.constant dense<0.000000e+00> : vector<4x128xf32>
    %17 = tpu.matmul %13, %1, %cst_5 {dimension_numbers = #tpu.dot_dimension_numbers<[1], [0], [0], [1], [0, 0, 1, 1], [], []>} : vector<4x128xbf16>, vector<128x128xbf16>, vector<4x128xf32> -> vector<4x128xf32>
    %cst_6 = arith.constant dense<0.000000e+00> : vector<4x128xf32>
    %18 = tpu.matmul %16, %1, %cst_6 {dimension_numbers = #tpu.dot_dimension_numbers<[1], [0], [0], [1], [0, 0, 1, 1], [], []>} : vector<4x128xbf16>, vector<128x128xbf16>, vector<4x128xf32> -> vector<4x128xf32>
    %19 = arith.addf %17, %18 : vector<4x128xf32>
    %cst_7 = arith.constant 0.0322580636 : f32
    %20 = vector.broadcast %cst_7 : f32 to vector<4x128xf32>
    %21 = arith.mulf %19, %20 : vector<4x128xf32>
    %22 = math.sqrt %21 : vector<4x128xf32>
    %cst_8 = arith.constant 1.000000e-03 : f32
    %23 = vector.broadcast %cst_8 : f32 to vector<4x128xf32>
    %24 = arith.addf %22, %23 : vector<4x128xf32>
    %cst_9 = arith.constant 1.000000e+00 : f32
    %25 = vector.broadcast %cst_9 : f32 to vector<4x128xf32>
    %26 = arith.divf %25, %24 : vector<4x128xf32>
    %27 = arith.mulf %11, %26 : vector<4x128xf32>
    %c0_10 = arith.constant 0 : index
    %c0_11 = arith.constant 0 : index
    %28 = vector.load %arg2[%c0_10, %c0_11] : memref<1x128xf32, #tpu.memory_space<vmem>>, vector<1x128xf32>
    %29 = vector.broadcast %28 : vector<1x128xf32> to vector<4x128xf32>
    %30 = arith.mulf %27, %29 : vector<4x128xf32>
    %c0_12 = arith.constant 0 : index
    %c0_13 = arith.constant 0 : index
    %31 = vector.load %arg3[%c0_12, %c0_13] : memref<1x128xf32, #tpu.memory_space<vmem>>, vector<1x128xf32>
    %32 = vector.broadcast %31 : vector<1x128xf32> to vector<4x128xf32>
    %33 = arith.addf %30, %32 : vector<4x128xf32>
    %c0_14 = arith.constant 0 : index
    %c0_15 = arith.constant 0 : index
    %34 = vector.load %arg5[%c0_14, %c0_15] : memref<4x128xf32, #tpu.memory_space<vmem>>, vector<4x128xf32>
    tpu.vector_store %arg5[%c0_14, %c0_15], %33 {strides = array<i32>} : memref<4x128xf32, #tpu.memory_space<vmem>>, vector<4x128xf32>,
    return
  }
  func.func @transform_0(%arg0: i32) -> (i32, i32) {
    %c0_i32 = arith.constant 0 : i32
    %c0_i32_0 = arith.constant 0 : i32
    return %arg0, %c0_i32 : i32, i32
  }
  func.func @transform_1(%arg0: i32) -> (i32, i32) {
    %c0_i32 = arith.constant 0 : i32
    %c0_i32_0 = arith.constant 0 : i32
    %c0_i32_1 = arith.constant 0 : i32
    return %c0_i32, %c0_i32_0 : i32, i32
  }
  func.func @transform_2(%arg0: i32) -> (i32, i32) {
    %c0_i32 = arith.constant 0 : i32
    %c0_i32_0 = arith.constant 0 : i32
    %c0_i32_1 = arith.constant 0 : i32
    return %c0_i32, %c0_i32_0 : i32, i32
  }
  func.func @transform_3(%arg0: i32) -> (i32, i32) {
    %c0_i32 = arith.constant 0 : i32
    %c0_i32_0 = arith.constant 0 : i32
    %c0_i32_1 = arith.constant 0 : i32
    return %c0_i32, %c0_i32_0 : i32, i32
  }
  func.func @transform_4(%arg0: i32) -> (i32, i32) {
    %c0_i32 = arith.constant 0 : i32
    %c0_i32_0 = arith.constant 0 : i32
    return %arg0, %c0_i32 : i32, i32
  }
}

</mosaic_0001>

<llo_original>
// kernel: tpu_custom_call.1
$region0: #{tpu_custom_call.1}
  #allocation0 [shape = 'u32[]', space=smem, size = 0x4, offset = 0x4, fixed_abs, tag = 'smem constant byte address 0x4 - core index']
  #allocation1 [shape = 'u32[144,128]{1,0:T(1,128)}', space=vmem, size = 0x12000, scoped, tag = 'internal scratch']
  %s0 = inlined_call_operand.hbm [shape: f32[4,128], index: 0, kind: input, shape index: {}]
  %s1 = inlined_call_operand.vmem [shape: f32[1,128], index: 1, kind: input, shape index: {}]
  %s2 = inlined_call_operand.vmem [shape: f32[1,128], index: 2, kind: input, shape index: {}]
  %s3 = inlined_call_operand.hbm [shape: bf16[128,128], index: 3, kind: input, shape index: {}]
  %s4 = inlined_call_operand.hbm [shape: f32[4,128], index: 4, kind: output, shape index: {}]
  %s5 = sld [smem:[#allocation0]]
  $region34: #{tpu_custom_call.1} parent=0
    _
  %s7 = ssub.s32 1, %s5
  %s8 = scalar_select 0, %s7, %s5
  $region1: #{tpu_custom_call.1} parent=0
    #allocation2 [shape = 'u8[2048]{0}', space=vmem, size = 0x800, scoped, tag = 'input window, operand 0, single buffered']
    #allocation3 [shape = 's32[1]{0}', space=sflag, size = 0x4, scoped, tag = 'scoped memory for tpu_custom_call.1']
    #allocation4 [shape = 's32[1]{0}', space=sflag, size = 0x4, scoped, tag = 'scoped memory for tpu_custom_call.1']
    #allocation5 [shape = 'u8[32768]{0}', space=vmem, size = 0x8000, scoped, tag = 'input window, operand 3, single buffered']
    #allocation6 [shape = 's32[1]{0}', space=sflag, size = 0x4, scoped, tag = 'scoped memory for tpu_custom_call.1']
    #allocation7 [shape = 'u8[2048]{0}', space=vmem, size = 0x800, scoped, tag = 'output window, operand 0, single buffered']
    %9 = vsyncpa [#allocation3], 0
    %10 = vsyncpa [#allocation6], 0
    %11 = vsyncpa [#allocation4], 0
    // Predicated region
    $region2: #{tpu_custom_call.1} parent=1 // pred_check
      _
    $region3: #{tpu_custom_call.1} parent=1 // pred_check_branch
      %13 = sbr.rel (0) target = $region5
    $region4: #{tpu_custom_call.1} parent=1 // pred_region
      %s15 = ssub.s32 64, 64
      %16 = vsyncadd [#allocation3], %s15
      %s18 = sshll.u32 [#allocation2], 4
      %s19 = int_to_ptr.vmem [resolvable:$true] %s18
      %21 = dma.hbm_to_vmem [thread:$0]  %s0, 64, %s19, [#allocation3]
    $region5: #{tpu_custom_call.1} parent=1 // pred_fallthru
      _
    // Predicated region
    $region6: #{tpu_custom_call.1} parent=1 // pred_check
      _
    $region7: #{tpu_custom_call.1} parent=1 // pred_check_branch
      %23 = sbr.rel (0) target = $region9
    $region8: #{tpu_custom_call.1} parent=1 // pred_region
      _
    $region9: #{tpu_custom_call.1} parent=1 // pred_fallthru
      _
    // Predicated region
    $region10: #{tpu_custom_call.1} parent=1 // pred_check
      _
    $region11: #{tpu_custom_call.1} parent=1 // pred_check_branch
      %25 = sbr.rel (0) target = $region13
    $region12: #{tpu_custom_call.1} parent=1 // pred_region
      _
    $region13: #{tpu_custom_call.1} parent=1 // pred_fallthru
      _
    // Predicated region
    $region14: #{tpu_custom_call.1} parent=1 // pred_check
      _
    $region15: #{tpu_custom_call.1} parent=1 // pred_check_branch
      %27 = sbr.rel (0) target = $region17
    $region16: #{tpu_custom_call.1} parent=1 // pred_region
      %s29 = ssub.s32 1024, 1024
      %30 = vsyncadd [#allocation6], %s29
      %s31 = sshll.u32 [#allocation5], 4
      %s32 = int_to_ptr.vmem [resolvable:$true] %s31
      %37 = dma.hbm_to_vmem [thread:$0]  %s3, 1024, %s32, [#allocation6], 64, 64, 4
    $region17: #{tpu_custom_call.1} parent=1 // pred_fallthru
      _
    // Predicated region
    $region18: #{tpu_custom_call.1} parent=1 // pred_check
      _
    $region19: #{tpu_custom_call.1} parent=1 // pred_check_branch
      %39 = sbr.rel (0) target = $region21
    $region20: #{tpu_custom_call.1} parent=1 // pred_region
      %40 = dma.done [#allocation3], 64
    $region21: #{tpu_custom_call.1} parent=1 // pred_fallthru
      _
    // Predicated region
    $region22: #{tpu_custom_call.1} parent=1 // pred_check
      _
    $region23: #{tpu_custom_call.1} parent=1 // pred_check_branch
      %42 = sbr.rel (0) target = $region25
    $region24: #{tpu_custom_call.1} parent=1 // pred_region
      %43 = dma.done [#allocation6], 1024
    $region25: #{tpu_custom_call.1} parent=1 // pred_fallthru
      _
    %v45 = vld [vmem:[#allocation2] sm:$0xf]
    %v46 = vld [vmem:[#allocation5] sm:$0xf]
    %v47 = vld [vmem:[#allocation5 + $0x4] sm:$0xf]
    %v48 = vld [vmem:[#allocation5 + $0x8] sm:$0xf]
    %v49 = vld [vmem:[#allocation5 + $0xc] sm:$0xf]
    %v50 = vld [vmem:[#allocation5 + $0x10] sm:$0xf]
    %v51 = vld [vmem:[#allocation5 + $0x14] sm:$0xf]
    %v52 = vld [vmem:[#allocation5 + $0x18] sm:$0xf]
    %v53 = vld [vmem:[#allocation5 + $0x1c] sm:$0xf]
    %v54 = vld [vmem:[#allocation5 + $0x20] sm:$0xf]
    %v55 = vld [vmem:[#allocation5 + $0x24] sm:$0xf]
    %v56 = vld [vmem:[#allocation5 + $0x28] sm:$0xf]
    %v57 = vld [vmem:[#allocation5 + $0x2c] sm:$0xf]
    %v58 = vld [vmem:[#allocation5 + $0x30] sm:$0xf]
    %v59 = vld [vmem:[#allocation5 + $0x34] sm:$0xf]
    %v60 = vld [vmem:[#allocation5 + $0x38] sm:$0xf]
    %v61 = vld [vmem:[#allocation5 + $0x3c] sm:$0xf]
    %v62 = vpack.c.bf16 %v45, %v45
    %v63 = vunpack.c.l.bf16 %v62
    %v64 = vsub.f32 %v45, %v63
    %v65 = vpack.c.bf16 %v64, %v64
    %v82 = vunpack.c.l.b16 %v46
    %v83 = vunpack.c.l.b16 %v47
    %v84 = vunpack.c.l.b16 %v48
    %v85 = vunpack.c.l.b16 %v49
    %v86 = vunpack.c.l.b16 %v50
    %v87 = vunpack.c.l.b16 %v51
    %v88 = vunpack.c.l.b16 %v52
    %v89 = vunpack.c.l.b16 %v53
    %v90 = vunpack.c.l.b16 %v54
    %v91 = vunpack.c.l.b16 %v55
    %v92 = vunpack.c.l.b16 %v56
    %v93 = vunpack.c.l.b16 %v57
    %v94 = vunpack.c.l.b16 %v58
    %v95 = vunpack.c.l.b16 %v59
    %v96 = vunpack.c.l.b16 %v60
    %v97 = vunpack.c.l.b16 %v61
    %v98 = vpack.c.b16 %v83, %v82
    %v99 = vpack.c.b16 %v85, %v84
    %v100 = vpack.c.b16 %v87, %v86
    %v101 = vpack.c.b16 %v89, %v88
    %v102 = vpack.c.b16 %v91, %v90
    %v103 = vpack.c.b16 %v93, %v92
    %v104 = vpack.c.b16 %v95, %v94
    %v105 = vpack.c.b16 %v97, %v96
    %114 = vmatprep.subr.bf16.mxu0 0
    %115 = vmatpush1.bf16.msra.mxu0 %v98
    %116 = vmatprep.subr.bf16.mxu0 0
    %117 = vmatpush1.bf16.msra.mxu0 %v99
    %118 = vmatprep.subr.bf16.mxu0 0
    %119 = vmatpush1.bf16.msra.mxu0 %v100
    %120 = vmatprep.subr.bf16.mxu0 0
    %121 = vmatpush1.bf16.msra.mxu0 %v101
    %122 = vmatprep.subr.bf16.mxu0 0
    %123 = vmatpush1.bf16.msra.mxu0 %v102
    %124 = vmatprep.subr.bf16.mxu0 0
    %125 = vmatpush1.bf16.msra.mxu0 %v103
    %126 = vmatprep.subr.bf16.mxu0 0
    %127 = vmatpush1.bf16.msra.mxu0 %v104
    %128 = vmatprep.subr.bf16.mxu0 0
    %129 = vmatpush1.bf16.msra.mxu0 %v105
    %130 = vmatprep.subr.bf16.mxu0 0
    %131 = vmatpush1.bf16.msra.mxu0 0
    %132 = vmatprep.subr.bf16.mxu0 0
    %133 = vmatpush1.bf16.msra.mxu0 0
    %134 = vmatprep.subr.bf16.mxu0 0
    %135 = vmatpush1.bf16.msra.mxu0 0
    %136 = vmatprep.subr.bf16.mxu0 0
    %137 = vmatpush1.bf16.msra.mxu0 0
    %138 = vmatprep.subr.bf16.mxu0 0
    %139 = vmatpush1.bf16.msra.mxu0 0
    %140 = vmatprep.subr.bf16.mxu0 0
    %141 = vmatpush1.bf16.msra.mxu0 0
    %142 = vmatprep.subr.bf16.mxu0 0
    %143 = vmatpush1.bf16.msra.mxu0 0
    %144 = vmatprep.subr.bf16.mxu0 0
    %145 = vmatpush1.bf16.msra.mxu0 0
    %146 = vmatprep.mubr.bf16.mxu0 0
    %147 = vmatmul.mubr.bf16.gmra.mrb[0].mxu0 %v65
    %v148 = vpop.f32.mrb[0].mxu0
    %v149 = vadd.f32 0.0, %v148
    %v150 = vpop.f32.mrb[0].mxu0
    %v151 = vpop.f32.mrb[0].mxu0
    %v152 = vpop.f32.mrb[0].mxu0
    %153 = vdwg.mxu0
    %154 = vmatprep.subr.bf16.mxu0 0
    %155 = vmatpush1.bf16.msra.mxu0 %v98
    %156 = vmatprep.subr.bf16.mxu0 0
    %157 = vmatpush1.bf16.msra.mxu0 %v99
    %158 = vmatprep.subr.bf16.mxu0 0
    %159 = vmatpush1.bf16.msra.mxu0 %v100
    %160 = vmatprep.subr.bf16.mxu0 0
    %161 = vmatpush1.bf16.msra.mxu0 %v101
    %162 = vmatprep.subr.bf16.mxu0 0
    %163 = vmatpush1.bf16.msra.mxu0 %v102
    %164 = vmatprep.subr.bf16.mxu0 0
    %165 = vmatpush1.bf16.msra.mxu0 %v103
    %166 = vmatprep.subr.bf16.mxu0 0
    %167 = vmatpush1.bf16.msra.mxu0 %v104
    %168 = vmatprep.subr.bf16.mxu0 0
    %169 = vmatpush1.bf16.msra.mxu0 %v105
    %170 = vmatprep.subr.bf16.mxu0 0
    %171 = vmatpush1.bf16.msra.mxu0 0
    %172 = vmatprep.subr.bf16.mxu0 0
    %173 = vmatpush1.bf16.msra.mxu0 0
    %174 = vmatprep.subr.bf16.mxu0 0
    %175 = vmatpush1.bf16.msra.mxu0 0
    %176 = vmatprep.subr.bf16.mxu0 0
    %177 = vmatpush1.bf16.msra.mxu0 0
    %178 = vmatprep.subr.bf16.mxu0 0
    %179 = vmatpush1.bf16.msra.mxu0 0
    %180 = vmatprep.subr.bf16.mxu0 0
    %181 = vmatpush1.bf16.msra.mxu0 0
    %182 = vmatprep.subr.bf16.mxu0 0
    %183 = vmatpush1.bf16.msra.mxu0 0
    %184 = vmatprep.subr.bf16.mxu0 0
    %185 = vmatpush1.bf16.msra.mxu0 0
    %186 = vmatprep.mubr.bf16.mxu0 0
    %187 = vmatmul.mubr.bf16.gmra.mrb[0].mxu0 %v62
    %v188 = vpop.f32.mrb[0].mxu0
    %v189 = vadd.f32 %v149, %v188
    %v190 = vpop.f32.mrb[0].mxu0
    %v191 = vpop.f32.mrb[0].mxu0
    %v192 = vpop.f32.mrb[0].mxu0
    %193 = vdwg.mxu0
    %v194 = vmul.f32 %v189, 0.03125
    %v195 = vsub.f32 %v45, %v194
    %v196 = vmul.f32 %v195, %v195
    %v197 = vpack.c.bf16 %v196, %v196
    %v198 = vunpack.c.l.bf16 %v197
    %v199 = vsub.f32 %v196, %v198
    %v200 = vpack.c.bf16 %v199, %v199
    %201 = vmatprep.subr.bf16.mxu0 0
    %202 = vmatpush1.bf16.msra.mxu0 %v98
    %203 = vmatprep.subr.bf16.mxu0 0
    %204 = vmatpush1.bf16.msra.mxu0 %v99
    %205 = vmatprep.subr.bf16.mxu0 0
    %206 = vmatpush1.bf16.msra.mxu0 %v100
    %207 = vmatprep.subr.bf16.mxu0 0
    %208 = vmatpush1.bf16.msra.mxu0 %v101
    %209 = vmatprep.subr.bf16.mxu0 0
    %210 = vmatpush1.bf16.msra.mxu0 %v102
    %211 = vmatprep.subr.bf16.mxu0 0
    %212 = vmatpush1.bf16.msra.mxu0 %v103
    %213 = vmatprep.subr.bf16.mxu0 0
    %214 = vmatpush1.bf16.msra.mxu0 %v104
    %215 = vmatprep.subr.bf16.mxu0 0
    %216 = vmatpush1.bf16.msra.mxu0 %v105
    %217 = vmatprep.subr.bf16.mxu0 0
    %218 = vmatpush1.bf16.msra.mxu0 0
    %219 = vmatprep.subr.bf16.mxu0 0
    %220 = vmatpush1.bf16.msra.mxu0 0
    %221 = vmatprep.subr.bf16.mxu0 0
    %222 = vmatpush1.bf16.msra.mxu0 0
    %223 = vmatprep.subr.bf16.mxu0 0
    %224 = vmatpush1.bf16.msra.mxu0 0
    %225 = vmatprep.subr.bf16.mxu0 0
    %226 = vmatpush1.bf16.msra.mxu0 0
    %227 = vmatprep.subr.bf16.mxu0 0
    %228 = vmatpush1.bf16.msra.mxu0 0
    %229 = vmatprep.subr.bf16.mxu0 0
    %230 = vmatpush1.bf16.msra.mxu0 0
    %231 = vmatprep.subr.bf16.mxu0 0
    %232 = vmatpush1.bf16.msra.mxu0 0
    %233 = vmatprep.mubr.bf16.mxu0 0
    %234 = vmatmul.mubr.bf16.gmra.mrb[0].mxu0 %v200
    %v235 = vpop.f32.mrb[0].mxu0
    %v236 = vadd.f32 0.0, %v235
    %v237 = vpop.f32.mrb[0].mxu0
    %v238 = vpop.f32.mrb[0].mxu0
    %v239 = vpop.f32.mrb[0].mxu0
    %240 = vdwg.mxu0
    %241 = vmatprep.subr.bf16.mxu0 0
    %242 = vmatpush1.bf16.msra.mxu0 %v98
    %243 = vmatprep.subr.bf16.mxu0 0
    %244 = vmatpush1.bf16.msra.mxu0 %v99
    %245 = vmatprep.subr.bf16.mxu0 0
    %246 = vmatpush1.bf16.msra.mxu0 %v100
    %247 = vmatprep.subr.bf16.mxu0 0
    %248 = vmatpush1.bf16.msra.mxu0 %v101
    %249 = vmatprep.subr.bf16.mxu0 0
    %250 = vmatpush1.bf16.msra.mxu0 %v102
    %251 = vmatprep.subr.bf16.mxu0 0
    %252 = vmatpush1.bf16.msra.mxu0 %v103
    %253 = vmatprep.subr.bf16.mxu0 0
    %254 = vmatpush1.bf16.msra.mxu0 %v104
    %255 = vmatprep.subr.bf16.mxu0 0
    %256 = vmatpush1.bf16.msra.mxu0 %v105
    %257 = vmatprep.subr.bf16.mxu0 0
    %258 = vmatpush1.bf16.msra.mxu0 0
    %259 = vmatprep.subr.bf16.mxu0 0
    %260 = vmatpush1.bf16.msra.mxu0 0
    %261 = vmatprep.subr.bf16.mxu0 0
    %262 = vmatpush1.bf16.msra.mxu0 0
    %263 = vmatprep.subr.bf16.mxu0 0
    %264 = vmatpush1.bf16.msra.mxu0 0
    %265 = vmatprep.subr.bf16.mxu0 0
    %266 = vmatpush1.bf16.msra.mxu0 0
    %267 = vmatprep.subr.bf16.mxu0 0
    %268 = vmatpush1.bf16.msra.mxu0 0
    %269 = vmatprep.subr.bf16.mxu0 0
    %270 = vmatpush1.bf16.msra.mxu0 0
    %271 = vmatprep.subr.bf16.mxu0 0
    %272 = vmatpush1.bf16.msra.mxu0 0
    %273 = vmatprep.mubr.bf16.mxu0 0
    %274 = vmatmul.mubr.bf16.gmra.mrb[0].mxu0 %v197
    %v275 = vpop.f32.mrb[0].mxu0
    %v276 = vadd.f32 %v236, %v275
    %v277 = vpop.f32.mrb[0].mxu0
    %v278 = vpop.f32.mrb[0].mxu0
    %v279 = vpop.f32.mrb[0].mxu0
    %280 = vdwg.mxu0
    %v281 = vmul.f32 %v276, 0.032258064
    %v282 = vrsqrt.pop %v281
    %v283 = vmul.f32 %v281, %v282
    %vm284 = vcmp.eq.f32.partialorder %v281, inf
    %v285 = vsel %vm284, %v281, %v283
    %vm286 = vcmp.eq.f32.partialorder %v281, 0.0
    %v287 = vand.u32 %v281, 2147483648
    %v288 = vsel %vm286, %v287, %v285
    %v289 = vadd.f32 %v288, 0.001
    %v290 = vrcp.pop %v289
    %v291 = vmul.f32 1.0, %v290
    %v292 = vmul.f32 %v195, %v291
    %v293 = vld [vmem:[%s1] sm:$0x1]
    %v295 = vlaneseq
    %v296 = vshrl.u32 %v295, 7
    %v297 = vsub.s32 0, %v296
    %v298 = vrot.slane %v293, %v297
    %v300 = vmul.f32 %v292, %v298
    %v301 = vld [vmem:[%s2] sm:$0x1]
    %v303 = vlaneseq
    %v304 = vshrl.u32 %v303, 7
    %v305 = vsub.s32 0, %v304
    %v306 = vrot.slane %v301, %v305
    %v308 = vadd.f32 %v300, %v306
    %309 = vst [vmem:[#allocation7] sm:$0xf] %v308
    // Predicated region
    $region26: #{tpu_custom_call.1} parent=1 // pred_check
      _
    $region27: #{tpu_custom_call.1} parent=1 // pred_check_branch
      %311 = sbr.rel (0) target = $region29
    $region28: #{tpu_custom_call.1} parent=1 // pred_region
      %s313 = ssub.s32 64, 64
      %314 = vsyncadd [#allocation4], %s313
      %s316 = sshll.u32 [#allocation7], 4
      %s317 = int_to_ptr.vmem [resolvable:$true] %s316
      %319 = dma.vmem_to_hbm [thread:$0]  %s317, 64, %s4, [#allocation4]
    $region29: #{tpu_custom_call.1} parent=1 // pred_fallthru
      _
    // Predicated region
    $region30: #{tpu_custom_call.1} parent=1 // pred_check
      _
    $region31: #{tpu_custom_call.1} parent=1 // pred_check_branch
      %321 = sbr.rel (0) target = $region33
    $region32: #{tpu_custom_call.1} parent=1 // pred_region
      %322 = dma.done [#allocation4], 64
    $region33: #{tpu_custom_call.1} parent=1 // pred_fallthru
      _
    %323 = vsyncpa [#allocation3], 1
    %324 = vsyncpa [#allocation6], 1
    %325 = vsyncpa [#allocation4], 1

</llo_original>
